<compile_context>
chip_gen: v7x
topology: tpu7x:2x2x1
jax: 0.10.0
libtpu: 0.0.40
codegen_flags: <defaults>
</compile_context>

<pallas_src>
import jax
import jax.numpy as jnp
from jax.experimental import pallas as pl
from jax.experimental.pallas import tpu as pltpu

LANE = 128
NEG_FILL = -1e30    # bias on padded action lanes -> softmax assigns them exactly 0
MAX_TILE_B = 2048   # VMEM-safe batch-tile cap (few MiB per tile incl. double buffering)


def policy_net_kernel(x_ref, w1_ref, b1_ref, w2_ref, b2_ref, w3_ref, b3_ref,
                      out_ref):
    """Fused 3-layer MLP + softmax for one batch tile (x already bf16)."""
    # fc1 + ReLU   (dropout == identity in eval mode)
    h1 = jnp.dot(x_ref[...], w1_ref[...], preferred_element_type=jnp.float32)
    h1 = jnp.maximum(h1 + b1_ref[...], 0.0)

    # fc2 + ReLU   (dropout == identity in eval mode)
    h2 = jnp.dot(h1.astype(jnp.bfloat16), w2_ref[...],
                 preferred_element_type=jnp.float32)
    h2 = jnp.maximum(h2 + b2_ref[...], 0.0)

    # fc3 (padded action lanes carry a -1e30 bias so softmax zeroes them)
    logits = jnp.dot(h2.astype(jnp.bfloat16), w3_ref[...],
                     preferred_element_type=jnp.float32)
    logits = logits + b3_ref[...]

    # numerically stable softmax over the (lane-padded) action axis.
    # Exact divide (not approx reciprocal) so row sums are 1.0 to f32 precision.
    m = jnp.max(logits, axis=-1, keepdims=True)
    e = jnp.exp(logits - m)
    denom = jnp.sum(e, axis=-1, keepdims=True)
    out_ref[...] = (e / denom).astype(out_ref.dtype)


def _round_up(n, m):
    return ((n + m - 1) // m) * m


def _tensorcores_per_chip():
    """Best-effort TC-per-chip detection: v7x/v4/v5p dual-TC, v5e/v6e single-TC."""
    try:
        kind = jax.devices()[0].device_kind.lower()
    except Exception:
        return 1
    return 2 if any(tag in kind for tag in ("v7", "v4", "v5p")) else 1


def prepare_params(params):
    """One-time param prep (hoisted out of the per-call forward, per perf review):
    pad fc3's output axis to a lane-dense multiple of 128 so kernel stores are
    unmasked full-lane vst; pad lanes get a -1e30 bias so softmax makes them 0."""
    w1, b1, w2, b2, w3, b3 = params
    hidden_dim, action_dim = w3.shape
    act_pad = _round_up(action_dim, LANE)
    w3p = jnp.zeros((hidden_dim, act_pad), w3.dtype).at[:, :action_dim].set(w3)
    b3p = jnp.full((1, act_pad), NEG_FILL, jnp.float32).at[:, :action_dim].set(b3)
    return (w1, b1, w2, b2, w3p, b3p)


def make_policy_forward(state_dim, hidden_dim, action_dim, batch_size, *,
                        tile_b=None, single_buffered_weights=True):
    """Returns a jitted forward: x[B, state_dim] f32 -> probs[B, action_dim] f32."""
    act_pad = _round_up(action_dim, LANE)

    # Batch tiling: one fat step per TensorCore. Single-TC (v5e/v6e) -> grid=1
    # (per-step overhead ~0.35us is comparable to the compute here); dual-TC
    # (v7x) -> >=2 steps so the "parallel" axis shards across both cores.
    b_pad8 = _round_up(batch_size, 8)
    if tile_b is None:
        steps = _tensorcores_per_chip()
        tile_b = _round_up(pl.cdiv(b_pad8, steps), 8)
    tile_b = max(8, min(tile_b, MAX_TILE_B, b_pad8))
    b_pad = _round_up(b_pad8, tile_b)
    grid = (b_pad // tile_b,)

    # Weights/biases: constant block index -> VMEM-resident across grid steps.
    # They never change, so request a single pipeline buffer (no wasted 2nd copy).
    def resident(shape):
        kwargs = {}
        if single_buffered_weights:
            kwargs["pipeline_mode"] = pl.Buffered(1)
        return pl.BlockSpec(shape, lambda i, _nd=len(shape): (0,) * _nd, **kwargs)

    w_bytes = (state_dim * hidden_dim + hidden_dim * hidden_dim
               + hidden_dim * act_pad) * 2              # bf16 weights
    b_bytes = (2 * hidden_dim + act_pad) * 4            # f32 biases
    cost = pl.CostEstimate(
        flops=2 * b_pad * (state_dim * hidden_dim + hidden_dim * hidden_dim
                           + hidden_dim * act_pad),
        transcendentals=b_pad * act_pad,                 # softmax exp
        bytes_accessed=(b_pad * state_dim * 2            # bf16 x
                        + w_bytes + b_bytes
                        + b_pad * act_pad * 4),          # f32 probs out
    )

    call = pl.pallas_call(
        policy_net_kernel,
        out_shape=jax.ShapeDtypeStruct((b_pad, act_pad), jnp.float32),
        grid_spec=pltpu.PrefetchScalarGridSpec(
            num_scalar_prefetch=0,
            grid=grid,
            in_specs=[
                pl.BlockSpec((tile_b, state_dim), lambda i: (i, 0)),   # x: batch-tiled
                resident((state_dim, hidden_dim)), resident((1, hidden_dim)),
                resident((hidden_dim, hidden_dim)), resident((1, hidden_dim)),
                resident((hidden_dim, act_pad)), resident((1, act_pad)),
            ],
            out_specs=pl.BlockSpec((tile_b, act_pad), lambda i: (i, 0)),
        ),
        compiler_params=pltpu.CompilerParams(
            dimension_semantics=("parallel",),  # batch sharding on dual-TC chips
        ),
        cost_estimate=cost,
    )

    @jax.jit
    def forward(x, w1, b1, w2, b2, w3p, b3p):
        xp = x
        if b_pad != batch_size:
            xp = jnp.pad(xp, ((0, b_pad - batch_size), (0, 0)))
        xp = xp.astype(jnp.bfloat16)   # halve x DMA; kernel takes bf16 directly
        out = call(xp, w1, b1, w2, b2, w3p, b3p)
        return out[:batch_size, :action_dim]

    return forward


def policy_network_reference(x, params):
    """Pure-JAX f32 reference (eval mode: dropout == identity)."""
    w1, b1, w2, b2, w3, b3 = params
    h1 = jnp.maximum(x @ w1.astype(jnp.float32) + b1, 0.0)
    h2 = jnp.maximum(h1 @ w2.astype(jnp.float32) + b2, 0.0)
    logits = h2 @ w3.astype(jnp.float32) + b3
    return jax.nn.softmax(logits, axis=-1)


def init_params(key, state_dim, hidden_dim, action_dim):
    """nn.Linear-style U(-1/sqrt(fan_in), 1/sqrt(fan_in)) init; weights cast to bf16."""
    ks = jax.random.split(key, 6)

    def linear(kw, kb, fan_in, fan_out):
        bound = 1.0 / jnp.sqrt(fan_in)
        w = jax.random.uniform(kw, (fan_in, fan_out), jnp.float32, -bound, bound)
        b = jax.random.uniform(kb, (1, fan_out), jnp.float32, -bound, bound)
        return w.astype(jnp.bfloat16), b  # bf16 weights, f32 biases

    w1, b1 = linear(ks[0], ks[1], state_dim, hidden_dim)
    w2, b2 = linear(ks[2], ks[3], hidden_dim, hidden_dim)
    w3, b3 = linear(ks[4], ks[5], hidden_dim, action_dim)
    return (w1, b1, w2, b2, w3, b3)


if __name__ == "__main__":
    # Small shapes consistent with PolicyNetwork(state_dim, action_dim, hidden_dim);
    # hidden_dim=128 is lane/MXU aligned (use 256 on v6e/v7x for MXU-native tiles).
    batch, state_dim, hidden_dim, action_dim = 64, 16, 128, 8

    key = jax.random.PRNGKey(0)
    k_x, k_p = jax.random.split(key)

    x = jax.random.normal(k_x, (batch, state_dim), dtype=jnp.float32)
    params = init_params(k_p, state_dim, hidden_dim, action_dim)
    prepped = prepare_params(params)   # one-time padded-param prep (hoisted)

    def _run(single_buffered):
        fwd = make_policy_forward(state_dim, hidden_dim, action_dim, batch,
                                  single_buffered_weights=single_buffered)
        return jax.block_until_ready(fwd(x, *prepped))

    try:
        probs = _run(True)
    except Exception:
        # Fallback if this JAX build rejects pl.Buffered on the TPU pipeline.
        probs = _run(False)

    # sanity: valid probability distribution per row, matches f32 reference
    ref = policy_network_reference(x, params)
    assert probs.shape == (batch, action_dim)
    assert bool(jnp.all(jnp.isfinite(probs)))
    assert bool(jnp.allclose(jnp.sum(probs, axis=-1), 1.0, atol=1e-4))
    assert bool(jnp.allclose(probs, ref, atol=3e-2))

    print("KERNEL_OK")
</pallas_src>

<mosaic_0001>
module attributes {stable_mosaic.version = 11 : i64} {
  func.func @policy_net_kernel(%arg0: i32, %arg1: memref<64x16xbf16, #tpu.memory_space<vmem>>, %arg2: memref<16x128xbf16, #tpu.memory_space<vmem>>, %arg3: memref<1x128xf32, #tpu.memory_space<vmem>>, %arg4: memref<128x128xbf16, #tpu.memory_space<vmem>>, %arg5: memref<1x128xf32, #tpu.memory_space<vmem>>, %arg6: memref<128x128xbf16, #tpu.memory_space<vmem>>, %arg7: memref<1x128xf32, #tpu.memory_space<vmem>>, %arg8: memref<64x128xf32, #tpu.memory_space<vmem>>) attributes {dimension_semantics = [#tpu.dimension_semantics<parallel>], iteration_bounds = array<i64: 1>, scalar_prefetch = 0 : i64, scratch_operands = 0 : i64, tpu.core_type = #tpu.core_type<tc>, window_params = [{transform_indices = @transform_0, window_bounds = array<i64: 64, 16>}, {pipeline_mode = #tpu.pipeline_mode<synchronous>, transform_indices = @transform_1, window_bounds = array<i64: 16, 128>}, {pipeline_mode = #tpu.pipeline_mode<synchronous>, transform_indices = @transform_2, window_bounds = array<i64: 1, 128>}, {pipeline_mode = #tpu.pipeline_mode<synchronous>, transform_indices = @transform_3, window_bounds = array<i64: 128, 128>}, {pipeline_mode = #tpu.pipeline_mode<synchronous>, transform_indices = @transform_4, window_bounds = array<i64: 1, 128>}, {pipeline_mode = #tpu.pipeline_mode<synchronous>, transform_indices = @transform_5, window_bounds = array<i64: 128, 128>}, {pipeline_mode = #tpu.pipeline_mode<synchronous>, transform_indices = @transform_6, window_bounds = array<i64: 1, 128>}, {transform_indices = @transform_7, window_bounds = array<i64: 64, 128>}]} {
    %c0 = arith.constant 0 : index
    %c0_0 = arith.constant 0 : index
    %0 = vector.load %arg1[%c0, %c0_0] : memref<64x16xbf16, #tpu.memory_space<vmem>>, vector<64x16xbf16>
    %c0_1 = arith.constant 0 : index
    %c0_2 = arith.constant 0 : index
    %1 = vector.load %arg2[%c0_1, %c0_2] : memref<16x128xbf16, #tpu.memory_space<vmem>>, vector<16x128xbf16>
    %cst = arith.constant dense<0.000000e+00> : vector<64x128xf32>
    %2 = tpu.matmul %0, %1, %cst {dimension_numbers = #tpu.dot_dimension_numbers<[1], [0], [0], [1], [0, 0, 1, 1], [], []>} : vector<64x16xbf16>, vector<16x128xbf16>, vector<64x128xf32> -> vector<64x128xf32>
    %c0_3 = arith.constant 0 : index
    %c0_4 = arith.constant 0 : index
    %3 = vector.load %arg3[%c0_3, %c0_4] : memref<1x128xf32, #tpu.memory_space<vmem>>, vector<1x128xf32>
    %4 = vector.broadcast %3 : vector<1x128xf32> to vector<64x128xf32>
    %5 = arith.addf %2, %4 : vector<64x128xf32>
    %cst_5 = arith.constant 0.000000e+00 : f32
    %6 = vector.broadcast %cst_5 : f32 to vector<64x128xf32>
    %7 = arith.maximumf %5, %6 : vector<64x128xf32>
    %8 = arith.truncf %7 : vector<64x128xf32> to vector<64x128xbf16>
    %c0_6 = arith.constant 0 : index
    %c0_7 = arith.constant 0 : index
    %9 = vector.load %arg4[%c0_6, %c0_7] : memref<128x128xbf16, #tpu.memory_space<vmem>>, vector<128x128xbf16>
    %cst_8 = arith.constant dense<0.000000e+00> : vector<64x128xf32>
    %10 = tpu.matmul %8, %9, %cst_8 {dimension_numbers = #tpu.dot_dimension_numbers<[1], [0], [0], [1], [0, 0, 1, 1], [], []>} : vector<64x128xbf16>, vector<128x128xbf16>, vector<64x128xf32> -> vector<64x128xf32>
    %c0_9 = arith.constant 0 : index
    %c0_10 = arith.constant 0 : index
    %11 = vector.load %arg5[%c0_9, %c0_10] : memref<1x128xf32, #tpu.memory_space<vmem>>, vector<1x128xf32>
    %12 = vector.broadcast %11 : vector<1x128xf32> to vector<64x128xf32>
    %13 = arith.addf %10, %12 : vector<64x128xf32>
    %cst_11 = arith.constant 0.000000e+00 : f32
    %14 = vector.broadcast %cst_11 : f32 to vector<64x128xf32>
    %15 = arith.maximumf %13, %14 : vector<64x128xf32>
    %16 = arith.truncf %15 : vector<64x128xf32> to vector<64x128xbf16>
    %c0_12 = arith.constant 0 : index
    %c0_13 = arith.constant 0 : index
    %17 = vector.load %arg6[%c0_12, %c0_13] : memref<128x128xbf16, #tpu.memory_space<vmem>>, vector<128x128xbf16>
    %cst_14 = arith.constant dense<0.000000e+00> : vector<64x128xf32>
    %18 = tpu.matmul %16, %17, %cst_14 {dimension_numbers = #tpu.dot_dimension_numbers<[1], [0], [0], [1], [0, 0, 1, 1], [], []>} : vector<64x128xbf16>, vector<128x128xbf16>, vector<64x128xf32> -> vector<64x128xf32>
    %c0_15 = arith.constant 0 : index
    %c0_16 = arith.constant 0 : index
    %19 = vector.load %arg7[%c0_15, %c0_16] : memref<1x128xf32, #tpu.memory_space<vmem>>, vector<1x128xf32>
    %20 = vector.broadcast %19 : vector<1x128xf32> to vector<64x128xf32>
    %21 = arith.addf %18, %20 : vector<64x128xf32>
    %cst_17 = arith.constant dense<0xFF800000> : vector<64xf32>
    %22 = vector.multi_reduction <maximumf>, %21, %cst_17 [1] : vector<64x128xf32> to vector<64xf32>
    %23 = vector.shape_cast %22 : vector<64xf32> to vector<64x1xf32>
    %24 = vector.broadcast %23 : vector<64x1xf32> to vector<64x128xf32>
    %25 = arith.subf %21, %24 : vector<64x128xf32>
    %26 = math.exp %25 : vector<64x128xf32>
    %cst_18 = arith.constant dense<0.000000e+00> : vector<64xf32>
    %27 = vector.multi_reduction <add>, %26, %cst_18 [1] : vector<64x128xf32> to vector<64xf32>
    %28 = vector.shape_cast %27 : vector<64xf32> to vector<64x1xf32>
    %29 = vector.broadcast %28 : vector<64x1xf32> to vector<64x128xf32>
    %30 = arith.divf %26, %29 : vector<64x128xf32>
    %c0_19 = arith.constant 0 : index
    %c0_20 = arith.constant 0 : index
    %31 = vector.load %arg8[%c0_19, %c0_20] : memref<64x128xf32, #tpu.memory_space<vmem>>, vector<64x128xf32>
    tpu.vector_store %arg8[%c0_19, %c0_20], %30 {strides = array<i32>} : memref<64x128xf32, #tpu.memory_space<vmem>>, vector<64x128xf32>,
    return
  }
  func.func @transform_0(%arg0: i32) -> (i32, i32) {
    %c0_i32 = arith.constant 0 : i32
    %c0_i32_0 = arith.constant 0 : i32
    return %arg0, %c0_i32 : i32, i32
  }
  func.func @transform_1(%arg0: i32) -> (i32, i32) {
    %c0_i32 = arith.constant 0 : i32
    %c0_i32_0 = arith.constant 0 : i32
    %c0_i32_1 = arith.constant 0 : i32
    return %c0_i32, %c0_i32_0 : i32, i32
  }
  func.func @transform_2(%arg0: i32) -> (i32, i32) {
    %c0_i32 = arith.constant 0 : i32
    %c0_i32_0 = arith.constant 0 : i32
    %c0_i32_1 = arith.constant 0 : i32
    return %c0_i32, %c0_i32_0 : i32, i32
  }
  func.func @transform_3(%arg0: i32) -> (i32, i32) {
    %c0_i32 = arith.constant 0 : i32
    %c0_i32_0 = arith.constant 0 : i32
    %c0_i32_1 = arith.constant 0 : i32
    return %c0_i32, %c0_i32_0 : i32, i32
  }
  func.func @transform_4(%arg0: i32) -> (i32, i32) {
    %c0_i32 = arith.constant 0 : i32
    %c0_i32_0 = arith.constant 0 : i32
    %c0_i32_1 = arith.constant 0 : i32
    return %c0_i32, %c0_i32_0 : i32, i32
  }
  func.func @transform_5(%arg0: i32) -> (i32, i32) {
    %c0_i32 = arith.constant 0 : i32
    %c0_i32_0 = arith.constant 0 : i32
    %c0_i32_1 = arith.constant 0 : i32
    return %c0_i32, %c0_i32_0 : i32, i32
  }
  func.func @transform_6(%arg0: i32) -> (i32, i32) {
    %c0_i32 = arith.constant 0 : i32
    %c0_i32_0 = arith.constant 0 : i32
    %c0_i32_1 = arith.constant 0 : i32
    return %c0_i32, %c0_i32_0 : i32, i32
  }
  func.func @transform_7(%arg0: i32) -> (i32, i32) {
    %c0_i32 = arith.constant 0 : i32
    %c0_i32_0 = arith.constant 0 : i32
    return %arg0, %c0_i32 : i32, i32
  }
}

module attributes {stable_mosaic.version = 11 : i64} {
  func.func @policy_net_kernel(%arg0: i32, %arg1: memref<64x16xbf16, #tpu.memory_space<vmem>>, %arg2: memref<16x128xbf16, #tpu.memory_space<vmem>>, %arg3: memref<1x128xf32, #tpu.memory_space<vmem>>, %arg4: memref<128x128xbf16, #tpu.memory_space<vmem>>, %arg5: memref<1x128xf32, #tpu.memory_space<vmem>>, %arg6: memref<128x128xbf16, #tpu.memory_space<vmem>>, %arg7: memref<1x128xf32, #tpu.memory_space<vmem>>, %arg8: memref<64x128xf32, #tpu.memory_space<vmem>>) attributes {dimension_semantics = [#tpu.dimension_semantics<parallel>], iteration_bounds = array<i64: 1>, scalar_prefetch = 0 : i64, scratch_operands = 0 : i64, tpu.core_type = #tpu.core_type<tc>, window_params = [{transform_indices = @transform_0, window_bounds = array<i64: 64, 16>}, {pipeline_mode = #tpu.pipeline_mode<synchronous>, transform_indices = @transform_1, window_bounds = array<i64: 16, 128>}, {pipeline_mode = #tpu.pipeline_mode<synchronous>, transform_indices = @transform_2, window_bounds = array<i64: 1, 128>}, {pipeline_mode = #tpu.pipeline_mode<synchronous>, transform_indices = @transform_3, window_bounds = array<i64: 128, 128>}, {pipeline_mode = #tpu.pipeline_mode<synchronous>, transform_indices = @transform_4, window_bounds = array<i64: 1, 128>}, {pipeline_mode = #tpu.pipeline_mode<synchronous>, transform_indices = @transform_5, window_bounds = array<i64: 128, 128>}, {pipeline_mode = #tpu.pipeline_mode<synchronous>, transform_indices = @transform_6, window_bounds = array<i64: 1, 128>}, {transform_indices = @transform_7, window_bounds = array<i64: 64, 128>}]} {
    %c0 = arith.constant 0 : index
    %c0_0 = arith.constant 0 : index
    %0 = vector.load %arg1[%c0, %c0_0] : memref<64x16xbf16, #tpu.memory_space<vmem>>, vector<64x16xbf16>
    %c0_1 = arith.constant 0 : index
    %c0_2 = arith.constant 0 : index
    %1 = vector.load %arg2[%c0_1, %c0_2] : memref<16x128xbf16, #tpu.memory_space<vmem>>, vector<16x128xbf16>
    %cst = arith.constant dense<0.000000e+00> : vector<64x128xf32>
    %2 = tpu.matmul %0, %1, %cst {dimension_numbers = #tpu.dot_dimension_numbers<[1], [0], [0], [1], [0, 0, 1, 1], [], []>} : vector<64x16xbf16>, vector<16x128xbf16>, vector<64x128xf32> -> vector<64x128xf32>
    %c0_3 = arith.constant 0 : index
    %c0_4 = arith.constant 0 : index
    %3 = vector.load %arg3[%c0_3, %c0_4] : memref<1x128xf32, #tpu.memory_space<vmem>>, vector<1x128xf32>
    %4 = vector.broadcast %3 : vector<1x128xf32> to vector<64x128xf32>
    %5 = arith.addf %2, %4 : vector<64x128xf32>
    %cst_5 = arith.constant 0.000000e+00 : f32
    %6 = vector.broadcast %cst_5 : f32 to vector<64x128xf32>
    %7 = arith.maximumf %5, %6 : vector<64x128xf32>
    %8 = arith.truncf %7 : vector<64x128xf32> to vector<64x128xbf16>
    %c0_6 = arith.constant 0 : index
    %c0_7 = arith.constant 0 : index
    %9 = vector.load %arg4[%c0_6, %c0_7] : memref<128x128xbf16, #tpu.memory_space<vmem>>, vector<128x128xbf16>
    %cst_8 = arith.constant dense<0.000000e+00> : vector<64x128xf32>
    %10 = tpu.matmul %8, %9, %cst_8 {dimension_numbers = #tpu.dot_dimension_numbers<[1], [0], [0], [1], [0, 0, 1, 1], [], []>} : vector<64x128xbf16>, vector<128x128xbf16>, vector<64x128xf32> -> vector<64x128xf32>
    %c0_9 = arith.constant 0 : index
    %c0_10 = arith.constant 0 : index
    %11 = vector.load %arg5[%c0_9, %c0_10] : memref<1x128xf32, #tpu.memory_space<vmem>>, vector<1x128xf32>
    %12 = vector.broadcast %11 : vector<1x128xf32> to vector<64x128xf32>
    %13 = arith.addf %10, %12 : vector<64x128xf32>
    %cst_11 = arith.constant 0.000000e+00 : f32
    %14 = vector.broadcast %cst_11 : f32 to vector<64x128xf32>
    %15 = arith.maximumf %13, %14 : vector<64x128xf32>
    %16 = arith.truncf %15 : vector<64x128xf32> to vector<64x128xbf16>
    %c0_12 = arith.constant 0 : index
    %c0_13 = arith.constant 0 : index
    %17 = vector.load %arg6[%c0_12, %c0_13] : memref<128x128xbf16, #tpu.memory_space<vmem>>, vector<128x128xbf16>
    %cst_14 = arith.constant dense<0.000000e+00> : vector<64x128xf32>
    %18 = tpu.matmul %16, %17, %cst_14 {dimension_numbers = #tpu.dot_dimension_numbers<[1], [0], [0], [1], [0, 0, 1, 1], [], []>} : vector<64x128xbf16>, vector<128x128xbf16>, vector<64x128xf32> -> vector<64x128xf32>
    %c0_15 = arith.constant 0 : index
    %c0_16 = arith.constant 0 : index
    %19 = vector.load %arg7[%c0_15, %c0_16] : memref<1x128xf32, #tpu.memory_space<vmem>>, vector<1x128xf32>
    %20 = vector.broadcast %19 : vector<1x128xf32> to vector<64x128xf32>
    %21 = arith.addf %18, %20 : vector<64x128xf32>
    %cst_17 = arith.constant dense<0xFF800000> : vector<64xf32>
    %22 = vector.multi_reduction <maximumf>, %21, %cst_17 [1] : vector<64x128xf32> to vector<64xf32>
    %23 = vector.shape_cast %22 : vector<64xf32> to vector<64x1xf32>
    %24 = vector.broadcast %23 : vector<64x1xf32> to vector<64x128xf32>
    %25 = arith.subf %21, %24 : vector<64x128xf32>
    %26 = math.exp %25 : vector<64x128xf32>
    %cst_18 = arith.constant dense<0.000000e+00> : vector<64xf32>
    %27 = vector.multi_reduction <add>, %26, %cst_18 [1] : vector<64x128xf32> to vector<64xf32>
    %28 = vector.shape_cast %27 : vector<64xf32> to vector<64x1xf32>
    %29 = vector.broadcast %28 : vector<64x1xf32> to vector<64x128xf32>
    %30 = arith.divf %26, %29 : vector<64x128xf32>
    %c0_19 = arith.constant 0 : index
    %c0_20 = arith.constant 0 : index
    %31 = vector.load %arg8[%c0_19, %c0_20] : memref<64x128xf32, #tpu.memory_space<vmem>>, vector<64x128xf32>
    tpu.vector_store %arg8[%c0_19, %c0_20], %30 {strides = array<i32>} : memref<64x128xf32, #tpu.memory_space<vmem>>, vector<64x128xf32>,
    return
  }
  func.func @transform_0(%arg0: i32) -> (i32, i32) {
    %c0_i32 = arith.constant 0 : i32
    %c0_i32_0 = arith.constant 0 : i32
    return %arg0, %c0_i32 : i32, i32
  }
  func.func @transform_1(%arg0: i32) -> (i32, i32) {
    %c0_i32 = arith.constant 0 : i32
    %c0_i32_0 = arith.constant 0 : i32
    %c0_i32_1 = arith.constant 0 : i32
    return %c0_i32, %c0_i32_0 : i32, i32
  }
  func.func @transform_2(%arg0: i32) -> (i32, i32) {
    %c0_i32 = arith.constant 0 : i32
    %c0_i32_0 = arith.constant 0 : i32
    %c0_i32_1 = arith.constant 0 : i32
    return %c0_i32, %c0_i32_0 : i32, i32
  }
  func.func @transform_3(%arg0: i32) -> (i32, i32) {
    %c0_i32 = arith.constant 0 : i32
    %c0_i32_0 = arith.constant 0 : i32
    %c0_i32_1 = arith.constant 0 : i32
    return %c0_i32, %c0_i32_0 : i32, i32
  }
  func.func @transform_4(%arg0: i32) -> (i32, i32) {
    %c0_i32 = arith.constant 0 : i32
    %c0_i32_0 = arith.constant 0 : i32
    %c0_i32_1 = arith.constant 0 : i32
    return %c0_i32, %c0_i32_0 : i32, i32
  }
  func.func @transform_5(%arg0: i32) -> (i32, i32) {
    %c0_i32 = arith.constant 0 : i32
    %c0_i32_0 = arith.constant 0 : i32
    %c0_i32_1 = arith.constant 0 : i32
    return %c0_i32, %c0_i32_0 : i32, i32
  }
  func.func @transform_6(%arg0: i32) -> (i32, i32) {
    %c0_i32 = arith.constant 0 : i32
    %c0_i32_0 = arith.constant 0 : i32
    %c0_i32_1 = arith.constant 0 : i32
    return %c0_i32, %c0_i32_0 : i32, i32
  }
  func.func @transform_7(%arg0: i32) -> (i32, i32) {
    %c0_i32 = arith.constant 0 : i32
    %c0_i32_0 = arith.constant 0 : i32
    return %arg0, %c0_i32 : i32, i32
  }
}

</mosaic_0001>

<llo_original>
// kernel: forward.1
$region0: #{forward.1}
  #allocation0 [shape = 'u32[]', space=smem, size = 0x4, offset = 0x4, fixed_abs, tag = 'smem constant byte address 0x4 - core index']
  #allocation1 [shape = 'u32[144,128]{1,0:T(1,128)}', space=vmem, size = 0x12000, scoped, tag = 'internal scratch']
  %s0 = inlined_call_operand.vmem [shape: bf16[64,16], index: 0, kind: input, shape index: {}]
  %s1 = inlined_call_operand.vmem [shape: bf16[16,128], index: 1, kind: input, shape index: {}]
  %s2 = inlined_call_operand.vmem [shape: f32[1,128], index: 2, kind: input, shape index: {}]
  %s3 = inlined_call_operand.vmem [shape: bf16[128,128], index: 3, kind: input, shape index: {}]
  %s4 = inlined_call_operand.vmem [shape: f32[1,128], index: 4, kind: input, shape index: {}]
  %s5 = inlined_call_operand.hbm [shape: bf16[128,128], index: 5, kind: input, shape index: {}]
  %s6 = inlined_call_operand.vmem [shape: f32[1,128], index: 6, kind: input, shape index: {}]
  %s7 = inlined_call_operand.vmem [shape: f32[64,128], index: 7, kind: output, shape index: {}]
  %s8 = sld [smem:[#allocation0]]
  $region42: #{forward.1} parent=0
    _
  %s10 = ssub.s32 1, %s8
  %s11 = scalar_select 0, %s10, %s8
  $region1: #{forward.1} parent=0
    #allocation2 [shape = 'u8[32768]{0}', space=vmem, size = 0x8000, scoped, tag = 'input window, operand 5, single buffered']
    #allocation3 [shape = 's32[1]{0}', space=sflag, size = 0x4, scoped, tag = 'scoped memory for forward.1']
    %12 = vsyncpa [#allocation3], 0
    // Predicated region
    $region2: #{forward.1} parent=1 // pred_check
      _
    $region3: #{forward.1} parent=1 // pred_check_branch
      %14 = sbr.rel (0) target = $region5
    $region4: #{forward.1} parent=1 // pred_region
      _
    $region5: #{forward.1} parent=1 // pred_fallthru
      _
    // Predicated region
    $region6: #{forward.1} parent=1 // pred_check
      _
    $region7: #{forward.1} parent=1 // pred_check_branch
      %16 = sbr.rel (0) target = $region9
    $region8: #{forward.1} parent=1 // pred_region
      _
    $region9: #{forward.1} parent=1 // pred_fallthru
      _
    // Predicated region
    $region10: #{forward.1} parent=1 // pred_check
      _
    $region11: #{forward.1} parent=1 // pred_check_branch
      %18 = sbr.rel (0) target = $region13
    $region12: #{forward.1} parent=1 // pred_region
      _
    $region13: #{forward.1} parent=1 // pred_fallthru
      _
    // Predicated region
    $region14: #{forward.1} parent=1 // pred_check
      _
    $region15: #{forward.1} parent=1 // pred_check_branch
      %20 = sbr.rel (0) target = $region17
    $region16: #{forward.1} parent=1 // pred_region
      _
    $region17: #{forward.1} parent=1 // pred_fallthru
      _
    // Predicated region
    $region18: #{forward.1} parent=1 // pred_check
      _
    $region19: #{forward.1} parent=1 // pred_check_branch
      %22 = sbr.rel (0) target = $region21
    $region20: #{forward.1} parent=1 // pred_region
      _
    $region21: #{forward.1} parent=1 // pred_fallthru
      _
    // Predicated region
    $region22: #{forward.1} parent=1 // pred_check
      _
    $region23: #{forward.1} parent=1 // pred_check_branch
      %24 = sbr.rel (0) target = $region25
    $region24: #{forward.1} parent=1 // pred_region
      %s26 = ssub.s32 1024, 1024
      %27 = vsyncadd [#allocation3], %s26
      %s28 = sshll.u32 [#allocation2], 4
      %s29 = int_to_ptr.vmem [resolvable:$true] %s28
      %34 = dma.hbm_to_vmem [thread:$0]  %s5, 1024, %s29, [#allocation3], 64, 64, 4
    $region25: #{forward.1} parent=1 // pred_fallthru
      _
    // Predicated region
    $region26: #{forward.1} parent=1 // pred_check
      _
    $region27: #{forward.1} parent=1 // pred_check_branch
      %36 = sbr.rel (0) target = $region29
    $region28: #{forward.1} parent=1 // pred_region
      _
    $region29: #{forward.1} parent=1 // pred_fallthru
      _
    // Predicated region
    $region30: #{forward.1} parent=1 // pred_check
      _
    $region31: #{forward.1} parent=1 // pred_check_branch
      %38 = sbr.rel (0) target = $region33
    $region32: #{forward.1} parent=1 // pred_region
      %39 = dma.done [#allocation3], 1024
    $region33: #{forward.1} parent=1 // pred_fallthru
      _
    %v41 = vld [vmem:[%s0] sm:$0xf]
    %v42 = vld [vmem:[%s0 + $0x4] sm:$0xf]
    %v43 = vld [vmem:[%s0 + $0x8] sm:$0xf]
    %v44 = vld [vmem:[%s0 + $0xc] sm:$0xf]
    %v45 = vld [vmem:[%s0 + $0x10] sm:$0xf]
    %v46 = vld [vmem:[%s0 + $0x14] sm:$0xf]
    %v47 = vld [vmem:[%s0 + $0x18] sm:$0xf]
    %v48 = vld [vmem:[%s0 + $0x1c] sm:$0xf]
    %v49 = vld [vmem:[%s1] sm:$0xf]
    %v50 = vld [vmem:[%s1 + $0x4] sm:$0xf]
    %v51 = vld [vmem:[%s2] sm:$0x1]
    %v53 = vlaneseq
    %v54 = vshrl.u32 %v53, 7
    %v55 = vsub.s32 0, %v54
    %v56 = vrot.slane %v51, %v55
    %v66 = vunpack.c.l.b16 %v41
    %v67 = vunpack.c.l.b16 %v42
    %v68 = vunpack.c.l.b16 %v43
    %v69 = vunpack.c.l.b16 %v44
    %v70 = vunpack.c.l.b16 %v45
    %v71 = vunpack.c.l.b16 %v46
    %v72 = vunpack.c.l.b16 %v47
    %v73 = vunpack.c.l.b16 %v48
    %v74 = vpack.c.b16 %v67, %v66
    %v75 = vpack.c.b16 %v69, %v68
    %v76 = vpack.c.b16 %v71, %v70
    %v77 = vpack.c.b16 %v73, %v72
    %v80 = vunpack.c.l.b16 %v49
    %v81 = vunpack.c.l.b16 %v50
    %v82 = vpack.c.b16 %v81, %v80
    %vm84 = vcmask 130048
    %v86 = vsel %vm84, %v74, 0
    %v89 = vsel %vm84, %v75, 0
    %v92 = vsel %vm84, %v76, 0
    %v95 = vsel %vm84, %v77, 0
    %97 = vmatprep.subr.bf16.mxu0 0
    %98 = vmatpush1.bf16.msra.mxu0 %v82
    %99 = vmatprep.subr.bf16.mxu0 0
    %100 = vmatpush1.bf16.msra.mxu0 0
    %101 = vmatprep.subr.bf16.mxu0 0
    %102 = vmatpush1.bf16.msra.mxu0 0
    %103 = vmatprep.subr.bf16.mxu0 0
    %104 = vmatpush1.bf16.msra.mxu0 0
    %105 = vmatprep.subr.bf16.mxu0 0
    %106 = vmatpush1.bf16.msra.mxu0 0
    %107 = vmatprep.subr.bf16.mxu0 0
    %108 = vmatpush1.bf16.msra.mxu0 0
    %109 = vmatprep.subr.bf16.mxu0 0
    %110 = vmatpush1.bf16.msra.mxu0 0
    %111 = vmatprep.subr.bf16.mxu0 0
    %112 = vmatpush1.bf16.msra.mxu0 0
    %113 = vmatprep.subr.bf16.mxu0 0
    %114 = vmatpush1.bf16.msra.mxu0 0
    %115 = vmatprep.subr.bf16.mxu0 0
    %116 = vmatpush1.bf16.msra.mxu0 0
    %117 = vmatprep.subr.bf16.mxu0 0
    %118 = vmatpush1.bf16.msra.mxu0 0
    %119 = vmatprep.subr.bf16.mxu0 0
    %120 = vmatpush1.bf16.msra.mxu0 0
    %121 = vmatprep.subr.bf16.mxu0 0
    %122 = vmatpush1.bf16.msra.mxu0 0
    %123 = vmatprep.subr.bf16.mxu0 0
    %124 = vmatpush1.bf16.msra.mxu0 0
    %125 = vmatprep.subr.bf16.mxu0 0
    %126 = vmatpush1.bf16.msra.mxu0 0
    %127 = vmatprep.subr.bf16.mxu0 0
    %128 = vmatpush1.bf16.msra.mxu0 0
    %129 = vmatprep.mubr.bf16.mxu0 0
    %130 = vmatmul.mubr.bf16.gmra.mrb[0].mxu0 %v86
    %v131 = vpop.f32.mrb[0].mxu0
    %v132 = vadd.f32 %v56, %v131
    %v133 = vpop.f32.mrb[0].mxu0
    %v134 = vpop.f32.mrb[0].mxu0
    %v135 = vadd.f32 %v56, %v134
    %v136 = vpop.f32.mrb[0].mxu0
    %137 = vmatprep.mubr.bf16.mxu0 0
    %138 = vmatmul.mubr.bf16.gmra.mrb[0].mxu0 %v89
    %v139 = vpop.f32.mrb[0].mxu0
    %v140 = vadd.f32 %v56, %v139
    %v141 = vpop.f32.mrb[0].mxu0
    %v142 = vpop.f32.mrb[0].mxu0
    %v143 = vadd.f32 %v56, %v142
    %v144 = vpop.f32.mrb[0].mxu0
    %145 = vmatprep.mubr.bf16.mxu0 0
    %146 = vmatmul.mubr.bf16.gmra.mrb[0].mxu0 %v92
    %v147 = vpop.f32.mrb[0].mxu0
    %v148 = vadd.f32 %v56, %v147
    %v149 = vpop.f32.mrb[0].mxu0
    %v150 = vpop.f32.mrb[0].mxu0
    %v151 = vadd.f32 %v56, %v150
    %v152 = vpop.f32.mrb[0].mxu0
    %153 = vmatprep.mubr.bf16.mxu0 0
    %154 = vmatmul.mubr.bf16.gmra.mrb[0].mxu0 %v95
    %v155 = vpop.f32.mrb[0].mxu0
    %v156 = vadd.f32 %v56, %v155
    %v157 = vpop.f32.mrb[0].mxu0
    %v158 = vpop.f32.mrb[0].mxu0
    %v159 = vadd.f32 %v56, %v158
    %v160 = vpop.f32.mrb[0].mxu0
    %161 = vdwg.mxu0
    %v162 = vmax.f32 %v132, 0.0
    %v163 = vmax.f32 %v135, 0.0
    %v164 = vmax.f32 %v140, 0.0
    %v165 = vmax.f32 %v143, 0.0
    %v166 = vmax.f32 %v148, 0.0
    %v167 = vmax.f32 %v151, 0.0
    %v168 = vmax.f32 %v156, 0.0
    %v169 = vmax.f32 %v159, 0.0
    %v170 = vpack.c.bf16 %v163, %v162
    %v171 = vpack.c.bf16 %v165, %v164
    %v172 = vpack.c.bf16 %v167, %v166
    %v173 = vpack.c.bf16 %v169, %v168
    %v174 = vld [vmem:[%s3] sm:$0xf]
    %v175 = vld [vmem:[%s3 + $0x4] sm:$0xf]
    %v176 = vld [vmem:[%s3 + $0x8] sm:$0xf]
    %v177 = vld [vmem:[%s3 + $0xc] sm:$0xf]
    %v178 = vld [vmem:[%s3 + $0x10] sm:$0xf]
    %v179 = vld [vmem:[%s3 + $0x14] sm:$0xf]
    %v180 = vld [vmem:[%s3 + $0x18] sm:$0xf]
    %v181 = vld [vmem:[%s3 + $0x1c] sm:$0xf]
    %v182 = vld [vmem:[%s3 + $0x20] sm:$0xf]
    %v183 = vld [vmem:[%s3 + $0x24] sm:$0xf]
    %v184 = vld [vmem:[%s3 + $0x28] sm:$0xf]
    %v185 = vld [vmem:[%s3 + $0x2c] sm:$0xf]
    %v186 = vld [vmem:[%s3 + $0x30] sm:$0xf]
    %v187 = vld [vmem:[%s3 + $0x34] sm:$0xf]
    %v188 = vld [vmem:[%s3 + $0x38] sm:$0xf]
    %v189 = vld [vmem:[%s3 + $0x3c] sm:$0xf]
    %v190 = vld [vmem:[%s4] sm:$0x1]
    %v192 = vlaneseq
    %v193 = vshrl.u32 %v192, 7
    %v194 = vsub.s32 0, %v193
    %v195 = vrot.slane %v190, %v194
    %v213 = vunpack.c.l.b16 %v174
    %v214 = vunpack.c.l.b16 %v175
    %v215 = vunpack.c.l.b16 %v176
    %v216 = vunpack.c.l.b16 %v177
    %v217 = vunpack.c.l.b16 %v178
    %v218 = vunpack.c.l.b16 %v179
    %v219 = vunpack.c.l.b16 %v180
    %v220 = vunpack.c.l.b16 %v181
    %v221 = vunpack.c.l.b16 %v182
    %v222 = vunpack.c.l.b16 %v183
    %v223 = vunpack.c.l.b16 %v184
    %v224 = vunpack.c.l.b16 %v185
    %v225 = vunpack.c.l.b16 %v186
    %v226 = vunpack.c.l.b16 %v187
    %v227 = vunpack.c.l.b16 %v188
    %v228 = vunpack.c.l.b16 %v189
    %v229 = vpack.c.b16 %v214, %v213
    %v230 = vpack.c.b16 %v216, %v215
    %v231 = vpack.c.b16 %v218, %v217
    %v232 = vpack.c.b16 %v220, %v219
    %v233 = vpack.c.b16 %v222, %v221
    %v234 = vpack.c.b16 %v224, %v223
    %v235 = vpack.c.b16 %v226, %v225
    %v236 = vpack.c.b16 %v228, %v227
    %245 = vmatprep.subr.bf16.mxu0 0
    %246 = vmatpush1.bf16.msra.mxu0 %v229
    %247 = vmatprep.subr.bf16.mxu0 0
    %248 = vmatpush1.bf16.msra.mxu0 %v230
    %249 = vmatprep.subr.bf16.mxu0 0
    %250 = vmatpush1.bf16.msra.mxu0 %v231
    %251 = vmatprep.subr.bf16.mxu0 0
    %252 = vmatpush1.bf16.msra.mxu0 %v232
    %253 = vmatprep.subr.bf16.mxu0 0
    %254 = vmatpush1.bf16.msra.mxu0 %v233
    %255 = vmatprep.subr.bf16.mxu0 0
    %256 = vmatpush1.bf16.msra.mxu0 %v234
    %257 = vmatprep.subr.bf16.mxu0 0
    %258 = vmatpush1.bf16.msra.mxu0 %v235
    %259 = vmatprep.subr.bf16.mxu0 0
    %260 = vmatpush1.bf16.msra.mxu0 %v236
    %261 = vmatprep.subr.bf16.mxu0 0
    %262 = vmatpush1.bf16.msra.mxu0 0
    %263 = vmatprep.subr.bf16.mxu0 0
    %264 = vmatpush1.bf16.msra.mxu0 0
    %265 = vmatprep.subr.bf16.mxu0 0
    %266 = vmatpush1.bf16.msra.mxu0 0
    %267 = vmatprep.subr.bf16.mxu0 0
    %268 = vmatpush1.bf16.msra.mxu0 0
    %269 = vmatprep.subr.bf16.mxu0 0
    %270 = vmatpush1.bf16.msra.mxu0 0
    %271 = vmatprep.subr.bf16.mxu0 0
    %272 = vmatpush1.bf16.msra.mxu0 0
    %273 = vmatprep.subr.bf16.mxu0 0
    %274 = vmatpush1.bf16.msra.mxu0 0
    %275 = vmatprep.subr.bf16.mxu0 0
    %276 = vmatpush1.bf16.msra.mxu0 0
    %277 = vmatprep.mubr.bf16.mxu0 0
    %278 = vmatmul.mubr.bf16.gmra.mrb[0].mxu0 %v170
    %v279 = vpop.f32.mrb[0].mxu0
    %v280 = vadd.f32 %v195, %v279
    %v281 = vpop.f32.mrb[0].mxu0
    %v282 = vpop.f32.mrb[0].mxu0
    %v283 = vadd.f32 %v195, %v282
    %v284 = vpop.f32.mrb[0].mxu0
    %285 = vmatprep.mubr.bf16.mxu0 0
    %286 = vmatmul.mubr.bf16.gmra.mrb[0].mxu0 %v171
    %v287 = vpop.f32.mrb[0].mxu0
    %v288 = vadd.f32 %v195, %v287
    %v289 = vpop.f32.mrb[0].mxu0
    %v290 = vpop.f32.mrb[0].mxu0
    %v291 = vadd.f32 %v195, %v290
    %v292 = vpop.f32.mrb[0].mxu0
    %293 = vmatprep.mubr.bf16.mxu0 0
    %294 = vmatmul.mubr.bf16.gmra.mrb[0].mxu0 %v172
    %v295 = vpop.f32.mrb[0].mxu0
    %v296 = vadd.f32 %v195, %v295
    %v297 = vpop.f32.mrb[0].mxu0
    %v298 = vpop.f32.mrb[0].mxu0
    %v299 = vadd.f32 %v195, %v298
    %v300 = vpop.f32.mrb[0].mxu0
    %301 = vmatprep.mubr.bf16.mxu0 0
    %302 = vmatmul.mubr.bf16.gmra.mrb[0].mxu0 %v173
    %v303 = vpop.f32.mrb[0].mxu0
    %v304 = vadd.f32 %v195, %v303
    %v305 = vpop.f32.mrb[0].mxu0
    %v306 = vpop.f32.mrb[0].mxu0
    %v307 = vadd.f32 %v195, %v306
    %v308 = vpop.f32.mrb[0].mxu0
    %309 = vdwg.mxu0
    %v310 = vmax.f32 %v280, 0.0
    %v311 = vmax.f32 %v283, 0.0
    %v312 = vmax.f32 %v288, 0.0
    %v313 = vmax.f32 %v291, 0.0
    %v314 = vmax.f32 %v296, 0.0
    %v315 = vmax.f32 %v299, 0.0
    %v316 = vmax.f32 %v304, 0.0
    %v317 = vmax.f32 %v307, 0.0
    %v318 = vpack.c.bf16 %v311, %v310
    %v319 = vpack.c.bf16 %v313, %v312
    %v320 = vpack.c.bf16 %v315, %v314
    %v321 = vpack.c.bf16 %v317, %v316
    %v322 = vld [vmem:[#allocation2] sm:$0xf]
    %v323 = vld [vmem:[#allocation2 + $0x4] sm:$0xf]
    %v324 = vld [vmem:[#allocation2 + $0x8] sm:$0xf]
    %v325 = vld [vmem:[#allocation2 + $0xc] sm:$0xf]
    %v326 = vld [vmem:[#allocation2 + $0x10] sm:$0xf]
    %v327 = vld [vmem:[#allocation2 + $0x14] sm:$0xf]
    %v328 = vld [vmem:[#allocation2 + $0x18] sm:$0xf]
    %v329 = vld [vmem:[#allocation2 + $0x1c] sm:$0xf]
    %v330 = vld [vmem:[#allocation2 + $0x20] sm:$0xf]
    %v331 = vld [vmem:[#allocation2 + $0x24] sm:$0xf]
    %v332 = vld [vmem:[#allocation2 + $0x28] sm:$0xf]
    %v333 = vld [vmem:[#allocation2 + $0x2c] sm:$0xf]
    %v334 = vld [vmem:[#allocation2 + $0x30] sm:$0xf]
    %v335 = vld [vmem:[#allocation2 + $0x34] sm:$0xf]
    %v336 = vld [vmem:[#allocation2 + $0x38] sm:$0xf]
    %v337 = vld [vmem:[#allocation2 + $0x3c] sm:$0xf]
    %v338 = vld [vmem:[%s6] sm:$0x1]
    %v340 = vlaneseq
    %v341 = vshrl.u32 %v340, 7
    %v342 = vsub.s32 0, %v341
    %v343 = vrot.slane %v338, %v342
    %v361 = vunpack.c.l.b16 %v322
    %v362 = vunpack.c.l.b16 %v323
    %v363 = vunpack.c.l.b16 %v324
    %v364 = vunpack.c.l.b16 %v325
    %v365 = vunpack.c.l.b16 %v326
    %v366 = vunpack.c.l.b16 %v327
    %v367 = vunpack.c.l.b16 %v328
    %v368 = vunpack.c.l.b16 %v329
    %v369 = vunpack.c.l.b16 %v330
    %v370 = vunpack.c.l.b16 %v331
    %v371 = vunpack.c.l.b16 %v332
    %v372 = vunpack.c.l.b16 %v333
    %v373 = vunpack.c.l.b16 %v334
    %v374 = vunpack.c.l.b16 %v335
    %v375 = vunpack.c.l.b16 %v336
    %v376 = vunpack.c.l.b16 %v337
    %v377 = vpack.c.b16 %v362, %v361
    %v378 = vpack.c.b16 %v364, %v363
    %v379 = vpack.c.b16 %v366, %v365
    %v380 = vpack.c.b16 %v368, %v367
    %v381 = vpack.c.b16 %v370, %v369
    %v382 = vpack.c.b16 %v372, %v371
    %v383 = vpack.c.b16 %v374, %v373
    %v384 = vpack.c.b16 %v376, %v375
    %393 = vmatprep.subr.bf16.mxu0 0
    %394 = vmatpush1.bf16.msra.mxu0 %v377
    %395 = vmatprep.subr.bf16.mxu0 0
    %396 = vmatpush1.bf16.msra.mxu0 %v378
    %397 = vmatprep.subr.bf16.mxu0 0
    %398 = vmatpush1.bf16.msra.mxu0 %v379
    %399 = vmatprep.subr.bf16.mxu0 0
    %400 = vmatpush1.bf16.msra.mxu0 %v380
    %401 = vmatprep.subr.bf16.mxu0 0
    %402 = vmatpush1.bf16.msra.mxu0 %v381
    %403 = vmatprep.subr.bf16.mxu0 0
    %404 = vmatpush1.bf16.msra.mxu0 %v382
    %405 = vmatprep.subr.bf16.mxu0 0
    %406 = vmatpush1.bf16.msra.mxu0 %v383
    %407 = vmatprep.subr.bf16.mxu0 0
    %408 = vmatpush1.bf16.msra.mxu0 %v384
    %409 = vmatprep.subr.bf16.mxu0 0
    %410 = vmatpush1.bf16.msra.mxu0 0
    %411 = vmatprep.subr.bf16.mxu0 0
    %412 = vmatpush1.bf16.msra.mxu0 0
    %413 = vmatprep.subr.bf16.mxu0 0
    %414 = vmatpush1.bf16.msra.mxu0 0
    %415 = vmatprep.subr.bf16.mxu0 0
    %416 = vmatpush1.bf16.msra.mxu0 0
    %417 = vmatprep.subr.bf16.mxu0 0
    %418 = vmatpush1.bf16.msra.mxu0 0
    %419 = vmatprep.subr.bf16.mxu0 0
    %420 = vmatpush1.bf16.msra.mxu0 0
    %421 = vmatprep.subr.bf16.mxu0 0
    %422 = vmatpush1.bf16.msra.mxu0 0
    %423 = vmatprep.subr.bf16.mxu0 0
    %424 = vmatpush1.bf16.msra.mxu0 0
    %425 = vmatprep.mubr.bf16.mxu0 0
    %426 = vmatmul.mubr.bf16.gmra.mrb[0].mxu0 %v318
    %v427 = vpop.f32.mrb[0].mxu0
    %v428 = vadd.f32 %v343, %v427
    %v429 = vpop.f32.mrb[0].mxu0
    %v430 = vpop.f32.mrb[0].mxu0
    %v431 = vadd.f32 %v343, %v430
    %v432 = vpop.f32.mrb[0].mxu0
    %433 = vmatprep.mubr.bf16.mxu0 0
    %434 = vmatmul.mubr.bf16.gmra.mrb[0].mxu0 %v319
    %v435 = vpop.f32.mrb[0].mxu0
    %v436 = vadd.f32 %v343, %v435
    %v437 = vpop.f32.mrb[0].mxu0
    %v438 = vpop.f32.mrb[0].mxu0
    %v439 = vadd.f32 %v343, %v438
    %v440 = vpop.f32.mrb[0].mxu0
    %441 = vmatprep.mubr.bf16.mxu0 0
    %442 = vmatmul.mubr.bf16.gmra.mrb[0].mxu0 %v320
    %v443 = vpop.f32.mrb[0].mxu0
    %v444 = vadd.f32 %v343, %v443
    %v445 = vpop.f32.mrb[0].mxu0
    %v446 = vpop.f32.mrb[0].mxu0
    %v447 = vadd.f32 %v343, %v446
    %v448 = vpop.f32.mrb[0].mxu0
    %449 = vmatprep.mubr.bf16.mxu0 0
    %450 = vmatmul.mubr.bf16.gmra.mrb[0].mxu0 %v321
    %v451 = vpop.f32.mrb[0].mxu0
    %v452 = vadd.f32 %v343, %v451
    %v453 = vpop.f32.mrb[0].mxu0
    %v454 = vpop.f32.mrb[0].mxu0
    %v455 = vadd.f32 %v343, %v454
    %v456 = vpop.f32.mrb[0].mxu0
    %457 = vdwg.mxu0
    %458 = vmax.xlane.f32.xlu0 %v428
    %v459 = vpop.xlane.xlu0 %458
    %460 = vmax.xlane.f32.xlu0 %v431
    %v461 = vpop.xlane.xlu0 %460
    %462 = vmax.xlane.f32.xlu0 %v436
    %v463 = vpop.xlane.xlu0 %462
    %464 = vmax.xlane.f32.xlu0 %v439
    %v465 = vpop.xlane.xlu0 %464
    %466 = vmax.xlane.f32.xlu0 %v444
    %v467 = vpop.xlane.xlu0 %466
    %468 = vmax.xlane.f32.xlu0 %v447
    %v469 = vpop.xlane.xlu0 %468
    %470 = vmax.xlane.f32.xlu0 %v452
    %v471 = vpop.xlane.xlu0 %470
    %472 = vmax.xlane.f32.xlu0 %v455
    %v473 = vpop.xlane.xlu0 %472
    %v474 = vsub.f32 %v428, %v459
    %v475 = vsub.f32 %v431, %v461
    %v476 = vsub.f32 %v436, %v463
    %v477 = vsub.f32 %v439, %v465
    %v478 = vsub.f32 %v444, %v467
    %v479 = vsub.f32 %v447, %v469
    %v480 = vsub.f32 %v452, %v471
    %v481 = vsub.f32 %v455, %v473
    %v482 = vmul.f32 %v474, 1.442695
    %v483 = vpow.pop %v482
    %v484 = vmul.f32 %v475, 1.442695
    %v485 = vpow.pop %v484
    %v486 = vmul.f32 %v476, 1.442695
    %v487 = vpow.pop %v486
    %v488 = vmul.f32 %v477, 1.442695
    %v489 = vpow.pop %v488
    %v490 = vmul.f32 %v478, 1.442695
    %v491 = vpow.pop %v490
    %v492 = vmul.f32 %v479, 1.442695
    %v493 = vpow.pop %v492
    %v494 = vmul.f32 %v480, 1.442695
    %v495 = vpow.pop %v494
    %v496 = vmul.f32 %v481, 1.442695
    %v497 = vpow.pop %v496
    %498 = vadd.xlane.f32.xlu0 %v483
    %v499 = vpop.xlane.xlu0 %498
    %500 = vadd.xlane.f32.xlu0 %v485
    %v501 = vpop.xlane.xlu0 %500
    %502 = vadd.xlane.f32.xlu0 %v487
    %v503 = vpop.xlane.xlu0 %502
    %504 = vadd.xlane.f32.xlu0 %v489
    %v505 = vpop.xlane.xlu0 %504
    %506 = vadd.xlane.f32.xlu0 %v491
    %v507 = vpop.xlane.xlu0 %506
    %508 = vadd.xlane.f32.xlu0 %v493
    %v509 = vpop.xlane.xlu0 %508
    %510 = vadd.xlane.f32.xlu0 %v495
    %v511 = vpop.xlane.xlu0 %510
    %512 = vadd.xlane.f32.xlu0 %v497
    %v513 = vpop.xlane.xlu0 %512
    %v514 = vrcp.pop %v499
    %v515 = vmul.f32 %v483, %v514
    %v516 = vrcp.pop %v501
    %v517 = vmul.f32 %v485, %v516
    %v518 = vrcp.pop %v503
    %v519 = vmul.f32 %v487, %v518
    %v520 = vrcp.pop %v505
    %v521 = vmul.f32 %v489, %v520
    %v522 = vrcp.pop %v507
    %v523 = vmul.f32 %v491, %v522
    %v524 = vrcp.pop %v509
    %v525 = vmul.f32 %v493, %v524
    %v526 = vrcp.pop %v511
    %v527 = vmul.f32 %v495, %v526
    %v528 = vrcp.pop %v513
    %v529 = vmul.f32 %v497, %v528
    %530 = vst [vmem:[%s7] sm:$0xff] %v515
    %531 = vst [vmem:[%s7 + $0x8] sm:$0xff] %v517
    %532 = vst [vmem:[%s7 + $0x10] sm:$0xff] %v519
    %533 = vst [vmem:[%s7 + $0x18] sm:$0xff] %v521
    %534 = vst [vmem:[%s7 + $0x20] sm:$0xff] %v523
    %535 = vst [vmem:[%s7 + $0x28] sm:$0xff] %v525
    %536 = vst [vmem:[%s7 + $0x30] sm:$0xff] %v527
    %537 = vst [vmem:[%s7 + $0x38] sm:$0xff] %v529
    // Predicated region
    $region34: #{forward.1} parent=1 // pred_check
      _
    $region35: #{forward.1} parent=1 // pred_check_branch
      %539 = sbr.rel (0) target = $region37
    $region36: #{forward.1} parent=1 // pred_region
      _
    $region37: #{forward.1} parent=1 // pred_fallthru
      _
    // Predicated region
    $region38: #{forward.1} parent=1 // pred_check
      _
    $region39: #{forward.1} parent=1 // pred_check_branch
      %541 = sbr.rel (0) target = $region41
    $region40: #{forward.1} parent=1 // pred_region
      _
    $region41: #{forward.1} parent=1 // pred_fallthru
      _
    %542 = vsyncpa [#allocation3], 1

// kernel: forward.1
$region0: #{forward.1}
  #allocation0 [shape = 'u32[]', space=smem, size = 0x4, offset = 0x4, fixed_abs, tag = 'smem constant byte address 0x4 - core index']
  #allocation1 [shape = 'u32[144,128]{1,0:T(1,128)}', space=vmem, size = 0x12000, scoped, tag = 'internal scratch']
  %s0 = inlined_call_operand.vmem [shape: bf16[64,16], index: 0, kind: input, shape index: {}]
  %s1 = inlined_call_operand.vmem [shape: bf16[16,128], index: 1, kind: input, shape index: {}]
  %s2 = inlined_call_operand.vmem [shape: f32[1,128], index: 2, kind: input, shape index: {}]
  %s3 = inlined_call_operand.vmem [shape: bf16[128,128], index: 3, kind: input, shape index: {}]
  %s4 = inlined_call_operand.vmem [shape: f32[1,128], index: 4, kind: input, shape index: {}]
  %s5 = inlined_call_operand.hbm [shape: bf16[128,128], index: 5, kind: input, shape index: {}]
  %s6 = inlined_call_operand.vmem [shape: f32[1,128], index: 6, kind: input, shape index: {}]
  %s7 = inlined_call_operand.vmem [shape: f32[64,128], index: 7, kind: output, shape index: {}]
  %s8 = sld [smem:[#allocation0]]
  $region42: #{forward.1} parent=0
    _
  %s10 = ssub.s32 1, %s8
  %s11 = scalar_select 0, %s10, %s8
  $region1: #{forward.1} parent=0
    #allocation2 [shape = 'u8[32768]{0}', space=vmem, size = 0x8000, scoped, tag = 'input window, operand 5, single buffered']
    #allocation3 [shape = 's32[1]{0}', space=sflag, size = 0x4, scoped, tag = 'scoped memory for forward.1']
    %12 = vsyncpa [#allocation3], 0
    // Predicated region
    $region2: #{forward.1} parent=1 // pred_check
      _
    $region3: #{forward.1} parent=1 // pred_check_branch
      %14 = sbr.rel (0) target = $region5
    $region4: #{forward.1} parent=1 // pred_region
      _
    $region5: #{forward.1} parent=1 // pred_fallthru
      _
    // Predicated region
    $region6: #{forward.1} parent=1 // pred_check
      _
    $region7: #{forward.1} parent=1 // pred_check_branch
      %16 = sbr.rel (0) target = $region9
    $region8: #{forward.1} parent=1 // pred_region
      _
    $region9: #{forward.1} parent=1 // pred_fallthru
      _
    // Predicated region
    $region10: #{forward.1} parent=1 // pred_check
      _
    $region11: #{forward.1} parent=1 // pred_check_branch
      %18 = sbr.rel (0) target = $region13
    $region12: #{forward.1} parent=1 // pred_region
      _
    $region13: #{forward.1} parent=1 // pred_fallthru
      _
    // Predicated region
    $region14: #{forward.1} parent=1 // pred_check
      _
    $region15: #{forward.1} parent=1 // pred_check_branch
      %20 = sbr.rel (0) target = $region17
    $region16: #{forward.1} parent=1 // pred_region
      _
    $region17: #{forward.1} parent=1 // pred_fallthru
      _
    // Predicated region
    $region18: #{forward.1} parent=1 // pred_check
      _
    $region19: #{forward.1} parent=1 // pred_check_branch
      %22 = sbr.rel (0) target = $region21
    $region20: #{forward.1} parent=1 // pred_region
      _
    $region21: #{forward.1} parent=1 // pred_fallthru
      _
    // Predicated region
    $region22: #{forward.1} parent=1 // pred_check
      _
    $region23: #{forward.1} parent=1 // pred_check_branch
      %24 = sbr.rel (0) target = $region25
    $region24: #{forward.1} parent=1 // pred_region
      %s26 = ssub.s32 1024, 1024
      %27 = vsyncadd [#allocation3], %s26
      %s28 = sshll.u32 [#allocation2], 4
      %s29 = int_to_ptr.vmem [resolvable:$true] %s28
      %34 = dma.hbm_to_vmem [thread:$0]  %s5, 1024, %s29, [#allocation3], 64, 64, 4
    $region25: #{forward.1} parent=1 // pred_fallthru
      _
    // Predicated region
    $region26: #{forward.1} parent=1 // pred_check
      _
    $region27: #{forward.1} parent=1 // pred_check_branch
      %36 = sbr.rel (0) target = $region29
    $region28: #{forward.1} parent=1 // pred_region
      _
    $region29: #{forward.1} parent=1 // pred_fallthru
      _
    // Predicated region
    $region30: #{forward.1} parent=1 // pred_check
      _
    $region31: #{forward.1} parent=1 // pred_check_branch
      %38 = sbr.rel (0) target = $region33
    $region32: #{forward.1} parent=1 // pred_region
      %39 = dma.done [#allocation3], 1024
    $region33: #{forward.1} parent=1 // pred_fallthru
      _
    %v41 = vld [vmem:[%s0] sm:$0xf]
    %v42 = vld [vmem:[%s0 + $0x4] sm:$0xf]
    %v43 = vld [vmem:[%s0 + $0x8] sm:$0xf]
    %v44 = vld [vmem:[%s0 + $0xc] sm:$0xf]
    %v45 = vld [vmem:[%s0 + $0x10] sm:$0xf]
    %v46 = vld [vmem:[%s0 + $0x14] sm:$0xf]
    %v47 = vld [vmem:[%s0 + $0x18] sm:$0xf]
    %v48 = vld [vmem:[%s0 + $0x1c] sm:$0xf]
    %v49 = vld [vmem:[%s1] sm:$0xf]
    %v50 = vld [vmem:[%s1 + $0x4] sm:$0xf]
    %v51 = vld [vmem:[%s2] sm:$0x1]
    %v53 = vlaneseq
    %v54 = vshrl.u32 %v53, 7
    %v55 = vsub.s32 0, %v54
    %v56 = vrot.slane %v51, %v55
    %v66 = vunpack.c.l.b16 %v41
    %v67 = vunpack.c.l.b16 %v42
    %v68 = vunpack.c.l.b16 %v43
    %v69 = vunpack.c.l.b16 %v44
    %v70 = vunpack.c.l.b16 %v45
    %v71 = vunpack.c.l.b16 %v46
    %v72 = vunpack.c.l.b16 %v47
    %v73 = vunpack.c.l.b16 %v48
    %v74 = vpack.c.b16 %v67, %v66
    %v75 = vpack.c.b16 %v69, %v68
    %v76 = vpack.c.b16 %v71, %v70
    %v77 = vpack.c.b16 %v73, %v72
    %v80 = vunpack.c.l.b16 %v49
    %v81 = vunpack.c.l.b16 %v50
    %v82 = vpack.c.b16 %v81, %v80
    %vm84 = vcmask 130048
    %v86 = vsel %vm84, %v74, 0
    %v89 = vsel %vm84, %v75, 0
    %v92 = vsel %vm84, %v76, 0
    %v95 = vsel %vm84, %v77, 0
    %97 = vmatprep.subr.bf16.mxu0 0
    %98 = vmatpush1.bf16.msra.mxu0 %v82
    %99 = vmatprep.subr.bf16.mxu0 0
    %100 = vmatpush1.bf16.msra.mxu0 0
    %101 = vmatprep.subr.bf16.mxu0 0
    %102 = vmatpush1.bf16.msra.mxu0 0
    %103 = vmatprep.subr.bf16.mxu0 0
    %104 = vmatpush1.bf16.msra.mxu0 0
    %105 = vmatprep.subr.bf16.mxu0 0
    %106 = vmatpush1.bf16.msra.mxu0 0
    %107 = vmatprep.subr.bf16.mxu0 0
    %108 = vmatpush1.bf16.msra.mxu0 0
    %109 = vmatprep.subr.bf16.mxu0 0
    %110 = vmatpush1.bf16.msra.mxu0 0
    %111 = vmatprep.subr.bf16.mxu0 0
    %112 = vmatpush1.bf16.msra.mxu0 0
    %113 = vmatprep.subr.bf16.mxu0 0
    %114 = vmatpush1.bf16.msra.mxu0 0
    %115 = vmatprep.subr.bf16.mxu0 0
    %116 = vmatpush1.bf16.msra.mxu0 0
    %117 = vmatprep.subr.bf16.mxu0 0
    %118 = vmatpush1.bf16.msra.mxu0 0
    %119 = vmatprep.subr.bf16.mxu0 0
    %120 = vmatpush1.bf16.msra.mxu0 0
    %121 = vmatprep.subr.bf16.mxu0 0
    %122 = vmatpush1.bf16.msra.mxu0 0
    %123 = vmatprep.subr.bf16.mxu0 0
    %124 = vmatpush1.bf16.msra.mxu0 0
    %125 = vmatprep.subr.bf16.mxu0 0
    %126 = vmatpush1.bf16.msra.mxu0 0
    %127 = vmatprep.subr.bf16.mxu0 0
    %128 = vmatpush1.bf16.msra.mxu0 0
    %129 = vmatprep.mubr.bf16.mxu0 0
    %130 = vmatmul.mubr.bf16.gmra.mrb[0].mxu0 %v86
    %v131 = vpop.f32.mrb[0].mxu0
    %v132 = vadd.f32 %v56, %v131
    %v133 = vpop.f32.mrb[0].mxu0
    %v134 = vpop.f32.mrb[0].mxu0
    %v135 = vadd.f32 %v56, %v134
    %v136 = vpop.f32.mrb[0].mxu0
    %137 = vmatprep.mubr.bf16.mxu0 0
    %138 = vmatmul.mubr.bf16.gmra.mrb[0].mxu0 %v89
    %v139 = vpop.f32.mrb[0].mxu0
    %v140 = vadd.f32 %v56, %v139
    %v141 = vpop.f32.mrb[0].mxu0
    %v142 = vpop.f32.mrb[0].mxu0
    %v143 = vadd.f32 %v56, %v142
    %v144 = vpop.f32.mrb[0].mxu0
    %145 = vmatprep.mubr.bf16.mxu0 0
    %146 = vmatmul.mubr.bf16.gmra.mrb[0].mxu0 %v92
    %v147 = vpop.f32.mrb[0].mxu0
    %v148 = vadd.f32 %v56, %v147
    %v149 = vpop.f32.mrb[0].mxu0
    %v150 = vpop.f32.mrb[0].mxu0
    %v151 = vadd.f32 %v56, %v150
    %v152 = vpop.f32.mrb[0].mxu0
    %153 = vmatprep.mubr.bf16.mxu0 0
    %154 = vmatmul.mubr.bf16.gmra.mrb[0].mxu0 %v95
    %v155 = vpop.f32.mrb[0].mxu0
    %v156 = vadd.f32 %v56, %v155
    %v157 = vpop.f32.mrb[0].mxu0
    %v158 = vpop.f32.mrb[0].mxu0
    %v159 = vadd.f32 %v56, %v158
    %v160 = vpop.f32.mrb[0].mxu0
    %161 = vdwg.mxu0
    %v162 = vmax.f32 %v132, 0.0
    %v163 = vmax.f32 %v135, 0.0
    %v164 = vmax.f32 %v140, 0.0
    %v165 = vmax.f32 %v143, 0.0
    %v166 = vmax.f32 %v148, 0.0
    %v167 = vmax.f32 %v151, 0.0
    %v168 = vmax.f32 %v156, 0.0
    %v169 = vmax.f32 %v159, 0.0
    %v170 = vpack.c.bf16 %v163, %v162
    %v171 = vpack.c.bf16 %v165, %v164
    %v172 = vpack.c.bf16 %v167, %v166
    %v173 = vpack.c.bf16 %v169, %v168
    %v174 = vld [vmem:[%s3] sm:$0xf]
    %v175 = vld [vmem:[%s3 + $0x4] sm:$0xf]
    %v176 = vld [vmem:[%s3 + $0x8] sm:$0xf]
    %v177 = vld [vmem:[%s3 + $0xc] sm:$0xf]
    %v178 = vld [vmem:[%s3 + $0x10] sm:$0xf]
    %v179 = vld [vmem:[%s3 + $0x14] sm:$0xf]
    %v180 = vld [vmem:[%s3 + $0x18] sm:$0xf]
    %v181 = vld [vmem:[%s3 + $0x1c] sm:$0xf]
    %v182 = vld [vmem:[%s3 + $0x20] sm:$0xf]
    %v183 = vld [vmem:[%s3 + $0x24] sm:$0xf]
    %v184 = vld [vmem:[%s3 + $0x28] sm:$0xf]
    %v185 = vld [vmem:[%s3 + $0x2c] sm:$0xf]
    %v186 = vld [vmem:[%s3 + $0x30] sm:$0xf]
    %v187 = vld [vmem:[%s3 + $0x34] sm:$0xf]
    %v188 = vld [vmem:[%s3 + $0x38] sm:$0xf]
    %v189 = vld [vmem:[%s3 + $0x3c] sm:$0xf]
    %v190 = vld [vmem:[%s4] sm:$0x1]
    %v192 = vlaneseq
    %v193 = vshrl.u32 %v192, 7
    %v194 = vsub.s32 0, %v193
    %v195 = vrot.slane %v190, %v194
    %v213 = vunpack.c.l.b16 %v174
    %v214 = vunpack.c.l.b16 %v175
    %v215 = vunpack.c.l.b16 %v176
    %v216 = vunpack.c.l.b16 %v177
    %v217 = vunpack.c.l.b16 %v178
    %v218 = vunpack.c.l.b16 %v179
    %v219 = vunpack.c.l.b16 %v180
    %v220 = vunpack.c.l.b16 %v181
    %v221 = vunpack.c.l.b16 %v182
    %v222 = vunpack.c.l.b16 %v183
    %v223 = vunpack.c.l.b16 %v184
    %v224 = vunpack.c.l.b16 %v185
    %v225 = vunpack.c.l.b16 %v186
    %v226 = vunpack.c.l.b16 %v187
    %v227 = vunpack.c.l.b16 %v188
    %v228 = vunpack.c.l.b16 %v189
    %v229 = vpack.c.b16 %v214, %v213
    %v230 = vpack.c.b16 %v216, %v215
    %v231 = vpack.c.b16 %v218, %v217
    %v232 = vpack.c.b16 %v220, %v219
    %v233 = vpack.c.b16 %v222, %v221
    %v234 = vpack.c.b16 %v224, %v223
    %v235 = vpack.c.b16 %v226, %v225
    %v236 = vpack.c.b16 %v228, %v227
    %245 = vmatprep.subr.bf16.mxu0 0
    %246 = vmatpush1.bf16.msra.mxu0 %v229
    %247 = vmatprep.subr.bf16.mxu0 0
    %248 = vmatpush1.bf16.msra.mxu0 %v230
    %249 = vmatprep.subr.bf16.mxu0 0
    %250 = vmatpush1.bf16.msra.mxu0 %v231
    %251 = vmatprep.subr.bf16.mxu0 0
    %252 = vmatpush1.bf16.msra.mxu0 %v232
    %253 = vmatprep.subr.bf16.mxu0 0
    %254 = vmatpush1.bf16.msra.mxu0 %v233
    %255 = vmatprep.subr.bf16.mxu0 0
    %256 = vmatpush1.bf16.msra.mxu0 %v234
    %257 = vmatprep.subr.bf16.mxu0 0
    %258 = vmatpush1.bf16.msra.mxu0 %v235
    %259 = vmatprep.subr.bf16.mxu0 0
    %260 = vmatpush1.bf16.msra.mxu0 %v236
    %261 = vmatprep.subr.bf16.mxu0 0
    %262 = vmatpush1.bf16.msra.mxu0 0
    %263 = vmatprep.subr.bf16.mxu0 0
    %264 = vmatpush1.bf16.msra.mxu0 0
    %265 = vmatprep.subr.bf16.mxu0 0
    %266 = vmatpush1.bf16.msra.mxu0 0
    %267 = vmatprep.subr.bf16.mxu0 0
    %268 = vmatpush1.bf16.msra.mxu0 0
    %269 = vmatprep.subr.bf16.mxu0 0
    %270 = vmatpush1.bf16.msra.mxu0 0
    %271 = vmatprep.subr.bf16.mxu0 0
    %272 = vmatpush1.bf16.msra.mxu0 0
    %273 = vmatprep.subr.bf16.mxu0 0
    %274 = vmatpush1.bf16.msra.mxu0 0
    %275 = vmatprep.subr.bf16.mxu0 0
    %276 = vmatpush1.bf16.msra.mxu0 0
    %277 = vmatprep.mubr.bf16.mxu0 0
    %278 = vmatmul.mubr.bf16.gmra.mrb[0].mxu0 %v170
    %v279 = vpop.f32.mrb[0].mxu0
    %v280 = vadd.f32 %v195, %v279
    %v281 = vpop.f32.mrb[0].mxu0
    %v282 = vpop.f32.mrb[0].mxu0
    %v283 = vadd.f32 %v195, %v282
    %v284 = vpop.f32.mrb[0].mxu0
    %285 = vmatprep.mubr.bf16.mxu0 0
    %286 = vmatmul.mubr.bf16.gmra.mrb[0].mxu0 %v171
    %v287 = vpop.f32.mrb[0].mxu0
    %v288 = vadd.f32 %v195, %v287
    %v289 = vpop.f32.mrb[0].mxu0
    %v290 = vpop.f32.mrb[0].mxu0
    %v291 = vadd.f32 %v195, %v290
    %v292 = vpop.f32.mrb[0].mxu0
    %293 = vmatprep.mubr.bf16.mxu0 0
    %294 = vmatmul.mubr.bf16.gmra.mrb[0].mxu0 %v172
    %v295 = vpop.f32.mrb[0].mxu0
    %v296 = vadd.f32 %v195, %v295
    %v297 = vpop.f32.mrb[0].mxu0
    %v298 = vpop.f32.mrb[0].mxu0
    %v299 = vadd.f32 %v195, %v298
    %v300 = vpop.f32.mrb[0].mxu0
    %301 = vmatprep.mubr.bf16.mxu0 0
    %302 = vmatmul.mubr.bf16.gmra.mrb[0].mxu0 %v173
    %v303 = vpop.f32.mrb[0].mxu0
    %v304 = vadd.f32 %v195, %v303
    %v305 = vpop.f32.mrb[0].mxu0
    %v306 = vpop.f32.mrb[0].mxu0
    %v307 = vadd.f32 %v195, %v306
    %v308 = vpop.f32.mrb[0].mxu0
    %309 = vdwg.mxu0
    %v310 = vmax.f32 %v280, 0.0
    %v311 = vmax.f32 %v283, 0.0
    %v312 = vmax.f32 %v288, 0.0
    %v313 = vmax.f32 %v291, 0.0
    %v314 = vmax.f32 %v296, 0.0
    %v315 = vmax.f32 %v299, 0.0
    %v316 = vmax.f32 %v304, 0.0
    %v317 = vmax.f32 %v307, 0.0
    %v318 = vpack.c.bf16 %v311, %v310
    %v319 = vpack.c.bf16 %v313, %v312
    %v320 = vpack.c.bf16 %v315, %v314
    %v321 = vpack.c.bf16 %v317, %v316
    %v322 = vld [vmem:[#allocation2] sm:$0xf]
    %v323 = vld [vmem:[#allocation2 + $0x4] sm:$0xf]
    %v324 = vld [vmem:[#allocation2 + $0x8] sm:$0xf]
    %v325 = vld [vmem:[#allocation2 + $0xc] sm:$0xf]
    %v326 = vld [vmem:[#allocation2 + $0x10] sm:$0xf]
    %v327 = vld [vmem:[#allocation2 + $0x14] sm:$0xf]
    %v328 = vld [vmem:[#allocation2 + $0x18] sm:$0xf]
    %v329 = vld [vmem:[#allocation2 + $0x1c] sm:$0xf]
    %v330 = vld [vmem:[#allocation2 + $0x20] sm:$0xf]
    %v331 = vld [vmem:[#allocation2 + $0x24] sm:$0xf]
    %v332 = vld [vmem:[#allocation2 + $0x28] sm:$0xf]
    %v333 = vld [vmem:[#allocation2 + $0x2c] sm:$0xf]
    %v334 = vld [vmem:[#allocation2 + $0x30] sm:$0xf]
    %v335 = vld [vmem:[#allocation2 + $0x34] sm:$0xf]
    %v336 = vld [vmem:[#allocation2 + $0x38] sm:$0xf]
    %v337 = vld [vmem:[#allocation2 + $0x3c] sm:$0xf]
    %v338 = vld [vmem:[%s6] sm:$0x1]
    %v340 = vlaneseq
    %v341 = vshrl.u32 %v340, 7
    %v342 = vsub.s32 0, %v341
    %v343 = vrot.slane %v338, %v342
    %v361 = vunpack.c.l.b16 %v322
    %v362 = vunpack.c.l.b16 %v323
    %v363 = vunpack.c.l.b16 %v324
    %v364 = vunpack.c.l.b16 %v325
    %v365 = vunpack.c.l.b16 %v326
    %v366 = vunpack.c.l.b16 %v327
    %v367 = vunpack.c.l.b16 %v328
    %v368 = vunpack.c.l.b16 %v329
    %v369 = vunpack.c.l.b16 %v330
    %v370 = vunpack.c.l.b16 %v331
    %v371 = vunpack.c.l.b16 %v332
    %v372 = vunpack.c.l.b16 %v333
    %v373 = vunpack.c.l.b16 %v334
    %v374 = vunpack.c.l.b16 %v335
    %v375 = vunpack.c.l.b16 %v336
    %v376 = vunpack.c.l.b16 %v337
    %v377 = vpack.c.b16 %v362, %v361
    %v378 = vpack.c.b16 %v364, %v363
    %v379 = vpack.c.b16 %v366, %v365
    %v380 = vpack.c.b16 %v368, %v367
    %v381 = vpack.c.b16 %v370, %v369
    %v382 = vpack.c.b16 %v372, %v371
    %v383 = vpack.c.b16 %v374, %v373
    %v384 = vpack.c.b16 %v376, %v375
    %393 = vmatprep.subr.bf16.mxu0 0
    %394 = vmatpush1.bf16.msra.mxu0 %v377
    %395 = vmatprep.subr.bf16.mxu0 0
    %396 = vmatpush1.bf16.msra.mxu0 %v378
    %397 = vmatprep.subr.bf16.mxu0 0
    %398 = vmatpush1.bf16.msra.mxu0 %v379
    %399 = vmatprep.subr.bf16.mxu0 0
    %400 = vmatpush1.bf16.msra.mxu0 %v380
    %401 = vmatprep.subr.bf16.mxu0 0
    %402 = vmatpush1.bf16.msra.mxu0 %v381
    %403 = vmatprep.subr.bf16.mxu0 0
    %404 = vmatpush1.bf16.msra.mxu0 %v382
    %405 = vmatprep.subr.bf16.mxu0 0
    %406 = vmatpush1.bf16.msra.mxu0 %v383
    %407 = vmatprep.subr.bf16.mxu0 0
    %408 = vmatpush1.bf16.msra.mxu0 %v384
    %409 = vmatprep.subr.bf16.mxu0 0
    %410 = vmatpush1.bf16.msra.mxu0 0
    %411 = vmatprep.subr.bf16.mxu0 0
    %412 = vmatpush1.bf16.msra.mxu0 0
    %413 = vmatprep.subr.bf16.mxu0 0
    %414 = vmatpush1.bf16.msra.mxu0 0
    %415 = vmatprep.subr.bf16.mxu0 0
    %416 = vmatpush1.bf16.msra.mxu0 0
    %417 = vmatprep.subr.bf16.mxu0 0
    %418 = vmatpush1.bf16.msra.mxu0 0
    %419 = vmatprep.subr.bf16.mxu0 0
    %420 = vmatpush1.bf16.msra.mxu0 0
    %421 = vmatprep.subr.bf16.mxu0 0
    %422 = vmatpush1.bf16.msra.mxu0 0
    %423 = vmatprep.subr.bf16.mxu0 0
    %424 = vmatpush1.bf16.msra.mxu0 0
    %425 = vmatprep.mubr.bf16.mxu0 0
    %426 = vmatmul.mubr.bf16.gmra.mrb[0].mxu0 %v318
    %v427 = vpop.f32.mrb[0].mxu0
    %v428 = vadd.f32 %v343, %v427
    %v429 = vpop.f32.mrb[0].mxu0
    %v430 = vpop.f32.mrb[0].mxu0
    %v431 = vadd.f32 %v343, %v430
    %v432 = vpop.f32.mrb[0].mxu0
    %433 = vmatprep.mubr.bf16.mxu0 0
    %434 = vmatmul.mubr.bf16.gmra.mrb[0].mxu0 %v319
    %v435 = vpop.f32.mrb[0].mxu0
    %v436 = vadd.f32 %v343, %v435
    %v437 = vpop.f32.mrb[0].mxu0
    %v438 = vpop.f32.mrb[0].mxu0
    %v439 = vadd.f32 %v343, %v438
    %v440 = vpop.f32.mrb[0].mxu0
    %441 = vmatprep.mubr.bf16.mxu0 0
    %442 = vmatmul.mubr.bf16.gmra.mrb[0].mxu0 %v320
    %v443 = vpop.f32.mrb[0].mxu0
    %v444 = vadd.f32 %v343, %v443
    %v445 = vpop.f32.mrb[0].mxu0
    %v446 = vpop.f32.mrb[0].mxu0
    %v447 = vadd.f32 %v343, %v446
    %v448 = vpop.f32.mrb[0].mxu0
    %449 = vmatprep.mubr.bf16.mxu0 0
    %450 = vmatmul.mubr.bf16.gmra.mrb[0].mxu0 %v321
    %v451 = vpop.f32.mrb[0].mxu0
    %v452 = vadd.f32 %v343, %v451
    %v453 = vpop.f32.mrb[0].mxu0
    %v454 = vpop.f32.mrb[0].mxu0
    %v455 = vadd.f32 %v343, %v454
    %v456 = vpop.f32.mrb[0].mxu0
    %457 = vdwg.mxu0
    %458 = vmax.xlane.f32.xlu0 %v428
    %v459 = vpop.xlane.xlu0 %458
    %460 = vmax.xlane.f32.xlu0 %v431
    %v461 = vpop.xlane.xlu0 %460
    %462 = vmax.xlane.f32.xlu0 %v436
    %v463 = vpop.xlane.xlu0 %462
    %464 = vmax.xlane.f32.xlu0 %v439
    %v465 = vpop.xlane.xlu0 %464
    %466 = vmax.xlane.f32.xlu0 %v444
    %v467 = vpop.xlane.xlu0 %466
    %468 = vmax.xlane.f32.xlu0 %v447
    %v469 = vpop.xlane.xlu0 %468
    %470 = vmax.xlane.f32.xlu0 %v452
    %v471 = vpop.xlane.xlu0 %470
    %472 = vmax.xlane.f32.xlu0 %v455
    %v473 = vpop.xlane.xlu0 %472
    %v474 = vsub.f32 %v428, %v459
    %v475 = vsub.f32 %v431, %v461
    %v476 = vsub.f32 %v436, %v463
    %v477 = vsub.f32 %v439, %v465
    %v478 = vsub.f32 %v444, %v467
    %v479 = vsub.f32 %v447, %v469
    %v480 = vsub.f32 %v452, %v471
    %v481 = vsub.f32 %v455, %v473
    %v482 = vmul.f32 %v474, 1.442695
    %v483 = vpow.pop %v482
    %v484 = vmul.f32 %v475, 1.442695
    %v485 = vpow.pop %v484
    %v486 = vmul.f32 %v476, 1.442695
    %v487 = vpow.pop %v486
    %v488 = vmul.f32 %v477, 1.442695
    %v489 = vpow.pop %v488
    %v490 = vmul.f32 %v478, 1.442695
    %v491 = vpow.pop %v490
    %v492 = vmul.f32 %v479, 1.442695
    %v493 = vpow.pop %v492
    %v494 = vmul.f32 %v480, 1.442695
    %v495 = vpow.pop %v494
    %v496 = vmul.f32 %v481, 1.442695
    %v497 = vpow.pop %v496
    %498 = vadd.xlane.f32.xlu0 %v483
    %v499 = vpop.xlane.xlu0 %498
    %500 = vadd.xlane.f32.xlu0 %v485
    %v501 = vpop.xlane.xlu0 %500
    %502 = vadd.xlane.f32.xlu0 %v487
    %v503 = vpop.xlane.xlu0 %502
    %504 = vadd.xlane.f32.xlu0 %v489
    %v505 = vpop.xlane.xlu0 %504
    %506 = vadd.xlane.f32.xlu0 %v491
    %v507 = vpop.xlane.xlu0 %506
    %508 = vadd.xlane.f32.xlu0 %v493
    %v509 = vpop.xlane.xlu0 %508
    %510 = vadd.xlane.f32.xlu0 %v495
    %v511 = vpop.xlane.xlu0 %510
    %512 = vadd.xlane.f32.xlu0 %v497
    %v513 = vpop.xlane.xlu0 %512
    %v514 = vrcp.pop %v499
    %v515 = vmul.f32 %v483, %v514
    %v516 = vrcp.pop %v501
    %v517 = vmul.f32 %v485, %v516
    %v518 = vrcp.pop %v503
    %v519 = vmul.f32 %v487, %v518
    %v520 = vrcp.pop %v505
    %v521 = vmul.f32 %v489, %v520
    %v522 = vrcp.pop %v507
    %v523 = vmul.f32 %v491, %v522
    %v524 = vrcp.pop %v509
    %v525 = vmul.f32 %v493, %v524
    %v526 = vrcp.pop %v511
    %v527 = vmul.f32 %v495, %v526
    %v528 = vrcp.pop %v513
    %v529 = vmul.f32 %v497, %v528
    %530 = vst [vmem:[%s7] sm:$0xff] %v515
    %531 = vst [vmem:[%s7 + $0x8] sm:$0xff] %v517
    %532 = vst [vmem:[%s7 + $0x10] sm:$0xff] %v519
    %533 = vst [vmem:[%s7 + $0x18] sm:$0xff] %v521
    %534 = vst [vmem:[%s7 + $0x20] sm:$0xff] %v523
    %535 = vst [vmem:[%s7 + $0x28] sm:$0xff] %v525
    %536 = vst [vmem:[%s7 + $0x30] sm:$0xff] %v527
    %537 = vst [vmem:[%s7 + $0x38] sm:$0xff] %v529
    // Predicated region
    $region34: #{forward.1} parent=1 // pred_check
      _
    $region35: #{forward.1} parent=1 // pred_check_branch
      %539 = sbr.rel (0) target = $region37
    $region36: #{forward.1} parent=1 // pred_region
      _
    $region37: #{forward.1} parent=1 // pred_fallthru
      _
    // Predicated region
    $region38: #{forward.1} parent=1 // pred_check
      _
    $region39: #{forward.1} parent=1 // pred_check_branch
      %541 = sbr.rel (0) target = $region41
    $region40: #{forward.1} parent=1 // pred_region
      _
    $region41: #{forward.1} parent=1 // pred_fallthru
      _
    %542 = vsyncpa [#allocation3], 1

</llo_original>
